<compile_context>
chip_gen: v5e
topology: v5e:2x2
jax: 0.10.0
libtpu: 0.0.40
codegen_flags: <defaults>
</compile_context>

<pallas_src>
import functools

import jax
import jax.numpy as jnp
from jax import lax
from jax.experimental import pallas as pl
from jax.experimental.pallas import tpu as pltpu

_UNROLL_SEQ_MAX = 32   # full unroll + value-resident gates_x up to this length
_PARTIAL_UNROLL = 8    # partial unroll for the fori_loop fallback (S > 32)


def _gate_update(gates, c, hidden):
    """PyTorch gate order (i, f, g, o). Slice before the transcendentals so the
    EUP does exactly 4H lanes of work per step."""
    i_g = jax.nn.sigmoid(gates[:, 0 * hidden:1 * hidden])
    f_g = jax.nn.sigmoid(gates[:, 1 * hidden:2 * hidden])
    g_g = jnp.tanh(gates[:, 2 * hidden:3 * hidden])
    o_g = jax.nn.sigmoid(gates[:, 3 * hidden:4 * hidden])
    c_new = f_g * c + i_g * g_g
    h_new = o_g * jnp.tanh(c_new)
    return h_new, c_new


def _lstm_kernel_small(x_ref, wih_ref, whh_ref, b_ref, hout_ref,
                       *, seq_len, batch, hidden):
    """Small-S path: value-resident gates_x, fully unrolled recurrence."""
    # Hoisted input projection for ALL timesteps, bias folded in (one matmul).
    gx = (jnp.dot(x_ref[...], wih_ref[...], preferred_element_type=jnp.float32)
          + b_ref[...])                                   # (S*Bp, 4H) value

    whh = whh_ref[...]                                    # (H, 4H) f32, resident
    h = jnp.zeros((batch, hidden), jnp.float32)
    c = jnp.zeros((batch, hidden), jnp.float32)

    for t in range(seq_len):                              # fully unrolled, static slices
        gates = (gx[t * batch:(t + 1) * batch, :]
                 + jnp.dot(h, whh, preferred_element_type=jnp.float32))
        h, c = _gate_update(gates, c, hidden)

    hout_ref[...] = h


def _lstm_kernel_large(x_ref, wih_ref, whh_ref, b_ref, hout_ref, gx_ref,
                       *, seq_len, batch, hidden):
    """Large-S path: gates_x in VMEM scratch, partially-unrolled fori_loop."""
    gx_ref[...] = (jnp.dot(x_ref[...], wih_ref[...],
                           preferred_element_type=jnp.float32) + b_ref[...])

    whh = whh_ref[...]                                    # (H, 4H) f32

    def step(t, carry):
        h, c = carry
        row = pl.multiple_of(t * batch, batch)            # batch is a multiple of 8
        gates = (gx_ref[pl.ds(row, batch), :]
                 + jnp.dot(h, whh, preferred_element_type=jnp.float32))
        return _gate_update(gates, c, hidden)

    h0 = jnp.zeros((batch, hidden), jnp.float32)
    c0 = jnp.zeros((batch, hidden), jnp.float32)
    h_n, _ = lax.fori_loop(0, seq_len, step, (h0, c0), unroll=_PARTIAL_UNROLL)

    hout_ref[...] = h_n


def lstm_net_forward(x, w_ih, w_hh, b_ih, b_hh):
    """
    x:    (S, B, E) float32 (time-major, nn.LSTM default batch_first=False)
    w_ih: (4H, E), w_hh: (4H, H), b_ih/b_hh: (4H,)   (PyTorch parameter layout)
    returns h_n[-1]: (B, H) float32
    """
    S, B, E = x.shape
    H4 = w_ih.shape[0]
    H = H4 // 4

    # Pad batch to a multiple of 8 sublanes (f32 vreg rows); padded rows are
    # computed then discarded.
    Bp = max(8, ((B + 7) // 8) * 8)
    if Bp != B:
        x = jnp.pad(x, ((0, 0), (0, Bp - B), (0, 0)))

    # Row-major (in, 4H) weights; everything f32 (no per-step casts).
    x_flat = x.reshape(S * Bp, E).astype(jnp.float32)          # (S*Bp, E)
    wih_t = jnp.transpose(w_ih).astype(jnp.float32)            # (E, 4H)
    whh_t = jnp.transpose(w_hh).astype(jnp.float32)            # (H, 4H)
    bias = (b_ih + b_hh).reshape(1, H4).astype(jnp.float32)    # (1, 4H)

    vmem_spec = pl.BlockSpec(memory_space=pltpu.MemorySpace.VMEM)

    if S <= _UNROLL_SEQ_MAX:
        kernel = functools.partial(
            _lstm_kernel_small, seq_len=S, batch=Bp, hidden=H)
        scratch_shapes = []
        compiler_params = None
    else:
        kernel = functools.partial(
            _lstm_kernel_large, seq_len=S, batch=Bp, hidden=H)
        scratch_shapes = [pltpu.VMEM((S * Bp, H4), jnp.float32)]  # gates_x
        vmem_need = 4 * (x_flat.size + wih_t.size + whh_t.size + bias.size
                         + S * Bp * H4 + Bp * H) + (2 << 20)
        compiler_params = pltpu.CompilerParams(
            vmem_limit_bytes=int(min(max(vmem_need, 32 << 20), 100 << 20)))

    h_pad = pl.pallas_call(
        kernel,
        out_shape=jax.ShapeDtypeStruct((Bp, H), jnp.float32),
        in_specs=[vmem_spec, vmem_spec, vmem_spec, vmem_spec],
        out_specs=vmem_spec,
        scratch_shapes=scratch_shapes,
        compiler_params=compiler_params,
    )(x_flat, wih_t, whh_t, bias)

    return h_pad[:B]


def lstm_net_reference(x, w_ih, w_hh, b_ih, b_hh):
    """Pure-JAX f32 reference matching torch.nn.LSTM semantics (zero init)."""
    S, B, E = x.shape
    H = w_hh.shape[1]
    wih_t = jnp.transpose(w_ih)
    whh_t = jnp.transpose(w_hh)
    bias = b_ih + b_hh
    hi = lax.Precision.HIGHEST

    def step(carry, x_t):
        h, c = carry
        gates = (jnp.dot(x_t, wih_t, precision=hi)
                 + jnp.dot(h, whh_t, precision=hi) + bias)
        i_g = jax.nn.sigmoid(gates[:, 0 * H:1 * H])
        f_g = jax.nn.sigmoid(gates[:, 1 * H:2 * H])
        g_g = jnp.tanh(gates[:, 2 * H:3 * H])
        o_g = jax.nn.sigmoid(gates[:, 3 * H:4 * H])
        c_new = f_g * c + i_g * g_g
        h_new = o_g * jnp.tanh(c_new)
        return (h_new, c_new), None

    h0 = jnp.zeros((B, H), jnp.float32)
    c0 = jnp.zeros((B, H), jnp.float32)
    (h_n, _), _ = jax.lax.scan(step, (h0, c0), x)
    return h_n


if __name__ == "__main__":
    # Shapes implied by the module's forward:
    # x: (seq_len, batch, embed_dim); num_layers=1, out_dim=hidden.
    SEQ, BATCH, EMBED, HIDDEN = 8, 2, 16, 32

    key = jax.random.PRNGKey(0)
    kx, k1, k2, k3, k4 = jax.random.split(key, 5)

    x = jax.random.normal(kx, (SEQ, BATCH, EMBED), dtype=jnp.float32)

    # Deterministic parameter init (uniform(-1/sqrt(H), 1/sqrt(H)) like PyTorch).
    bound = 1.0 / (HIDDEN ** 0.5)
    w_ih = jax.random.uniform(k1, (4 * HIDDEN, EMBED), jnp.float32, -bound, bound)
    w_hh = jax.random.uniform(k2, (4 * HIDDEN, HIDDEN), jnp.float32, -bound, bound)
    b_ih = jax.random.uniform(k3, (4 * HIDDEN,), jnp.float32, -bound, bound)
    b_hh = jax.random.uniform(k4, (4 * HIDDEN,), jnp.float32, -bound, bound)

    h_n = lstm_net_forward(x, w_ih, w_hh, b_ih, b_hh)
    h_n = jax.block_until_ready(h_n)

    h_ref = jax.block_until_ready(lstm_net_reference(x, w_ih, w_hh, b_ih, b_hh))
    assert h_n.shape == (BATCH, HIDDEN)
    # Kernel is all-f32 now (no bf16 operands); remaining diff is only MXU
    # f32 pass accumulation vs XLA HIGHEST-precision reference.
    assert jnp.allclose(h_n, h_ref, atol=1e-2, rtol=1e-2), "mismatch vs reference"

    print("KERNEL_OK")
</pallas_src>

<mosaic_0001>
module attributes {stable_mosaic.version = 11 : i64} {
  func.func @_lstm_kernel_small(%arg0: memref<64x16xf32, #tpu.memory_space<vmem>>, %arg1: memref<16x128xf32, #tpu.memory_space<vmem>>, %arg2: memref<32x128xf32, #tpu.memory_space<vmem>>, %arg3: memref<1x128xf32, #tpu.memory_space<vmem>>, %arg4: memref<8x32xf32, #tpu.memory_space<vmem>>) attributes {dimension_semantics = [], scalar_prefetch = 0 : i64, scratch_operands = 0 : i64, tpu.core_type = #tpu.core_type<tc>} {
    %c0 = arith.constant 0 : index
    %c0_0 = arith.constant 0 : index
    %0 = vector.load %arg0[%c0, %c0_0] : memref<64x16xf32, #tpu.memory_space<vmem>>, vector<64x16xf32>
    %c0_1 = arith.constant 0 : index
    %c0_2 = arith.constant 0 : index
    %1 = vector.load %arg1[%c0_1, %c0_2] : memref<16x128xf32, #tpu.memory_space<vmem>>, vector<16x128xf32>
    %cst = arith.constant dense<0.000000e+00> : vector<64x128xf32>
    %2 = tpu.matmul %0, %1, %cst {dimension_numbers = #tpu.dot_dimension_numbers<[1], [0], [0], [1], [0, 0, 1, 1], [], []>} : vector<64x16xf32>, vector<16x128xf32>, vector<64x128xf32> -> vector<64x128xf32>
    %c0_3 = arith.constant 0 : index
    %c0_4 = arith.constant 0 : index
    %3 = vector.load %arg3[%c0_3, %c0_4] : memref<1x128xf32, #tpu.memory_space<vmem>>, vector<1x128xf32>
    %4 = vector.broadcast %3 : vector<1x128xf32> to vector<64x128xf32>
    %5 = arith.addf %2, %4 : vector<64x128xf32>
    %c0_5 = arith.constant 0 : index
    %c0_6 = arith.constant 0 : index
    %6 = vector.load %arg2[%c0_5, %c0_6] : memref<32x128xf32, #tpu.memory_space<vmem>>, vector<32x128xf32>
    %cst_7 = arith.constant 0.000000e+00 : f32
    %7 = vector.broadcast %cst_7 : f32 to vector<8x32xf32>
    %cst_8 = arith.constant 0.000000e+00 : f32
    %8 = vector.broadcast %cst_8 : f32 to vector<8x32xf32>
    %9 = vector.extract_strided_slice %5 {offsets = [0, 0], sizes = [8, 128], strides = [1, 1]} : vector<64x128xf32> to vector<8x128xf32>
    %cst_9 = arith.constant dense<0.000000e+00> : vector<8x128xf32>
    %10 = tpu.matmul %7, %6, %cst_9 {dimension_numbers = #tpu.dot_dimension_numbers<[1], [0], [0], [1], [0, 0, 1, 1], [], []>} : vector<8x32xf32>, vector<32x128xf32>, vector<8x128xf32> -> vector<8x128xf32>
    %11 = arith.addf %9, %10 : vector<8x128xf32>
    %12 = vector.extract_strided_slice %11 {offsets = [0, 0], sizes = [8, 32], strides = [1, 1]} : vector<8x128xf32> to vector<8x32xf32>
    %13 = arith.negf %12 : vector<8x32xf32>
    %14 = math.exp %13 : vector<8x32xf32>
    %cst_10 = arith.constant 1.000000e+00 : f32
    %15 = vector.broadcast %cst_10 : f32 to vector<8x32xf32>
    %16 = arith.addf %15, %14 : vector<8x32xf32>
    %17 = arith.divf %15, %16 : vector<8x32xf32>
    %18 = vector.extract_strided_slice %11 {offsets = [0, 32], sizes = [8, 32], strides = [1, 1]} : vector<8x128xf32> to vector<8x32xf32>
    %19 = arith.negf %18 : vector<8x32xf32>
    %20 = math.exp %19 : vector<8x32xf32>
    %cst_11 = arith.constant 1.000000e+00 : f32
    %21 = vector.broadcast %cst_11 : f32 to vector<8x32xf32>
    %22 = arith.addf %21, %20 : vector<8x32xf32>
    %23 = arith.divf %21, %22 : vector<8x32xf32>
    %24 = vector.extract_strided_slice %11 {offsets = [0, 64], sizes = [8, 32], strides = [1, 1]} : vector<8x128xf32> to vector<8x32xf32>
    %25 = math.tanh %24 : vector<8x32xf32>
    %26 = vector.extract_strided_slice %11 {offsets = [0, 96], sizes = [8, 32], strides = [1, 1]} : vector<8x128xf32> to vector<8x32xf32>
    %27 = arith.negf %26 : vector<8x32xf32>
    %28 = math.exp %27 : vector<8x32xf32>
    %cst_12 = arith.constant 1.000000e+00 : f32
    %29 = vector.broadcast %cst_12 : f32 to vector<8x32xf32>
    %30 = arith.addf %29, %28 : vector<8x32xf32>
    %31 = arith.divf %29, %30 : vector<8x32xf32>
    %32 = arith.mulf %23, %8 : vector<8x32xf32>
    %33 = arith.mulf %17, %25 : vector<8x32xf32>
    %34 = arith.addf %32, %33 : vector<8x32xf32>
    %35 = math.tanh %34 : vector<8x32xf32>
    %36 = arith.mulf %31, %35 : vector<8x32xf32>
    %37 = vector.extract_strided_slice %5 {offsets = [8, 0], sizes = [8, 128], strides = [1, 1]} : vector<64x128xf32> to vector<8x128xf32>
    %cst_13 = arith.constant dense<0.000000e+00> : vector<8x128xf32>
    %38 = tpu.matmul %36, %6, %cst_13 {dimension_numbers = #tpu.dot_dimension_numbers<[1], [0], [0], [1], [0, 0, 1, 1], [], []>} : vector<8x32xf32>, vector<32x128xf32>, vector<8x128xf32> -> vector<8x128xf32>
    %39 = arith.addf %37, %38 : vector<8x128xf32>
    %40 = vector.extract_strided_slice %39 {offsets = [0, 0], sizes = [8, 32], strides = [1, 1]} : vector<8x128xf32> to vector<8x32xf32>
    %41 = arith.negf %40 : vector<8x32xf32>
    %42 = math.exp %41 : vector<8x32xf32>
    %cst_14 = arith.constant 1.000000e+00 : f32
    %43 = vector.broadcast %cst_14 : f32 to vector<8x32xf32>
    %44 = arith.addf %43, %42 : vector<8x32xf32>
    %45 = arith.divf %43, %44 : vector<8x32xf32>
    %46 = vector.extract_strided_slice %39 {offsets = [0, 32], sizes = [8, 32], strides = [1, 1]} : vector<8x128xf32> to vector<8x32xf32>
    %47 = arith.negf %46 : vector<8x32xf32>
    %48 = math.exp %47 : vector<8x32xf32>
    %cst_15 = arith.constant 1.000000e+00 : f32
    %49 = vector.broadcast %cst_15 : f32 to vector<8x32xf32>
    %50 = arith.addf %49, %48 : vector<8x32xf32>
    %51 = arith.divf %49, %50 : vector<8x32xf32>
    %52 = vector.extract_strided_slice %39 {offsets = [0, 64], sizes = [8, 32], strides = [1, 1]} : vector<8x128xf32> to vector<8x32xf32>
    %53 = math.tanh %52 : vector<8x32xf32>
    %54 = vector.extract_strided_slice %39 {offsets = [0, 96], sizes = [8, 32], strides = [1, 1]} : vector<8x128xf32> to vector<8x32xf32>
    %55 = arith.negf %54 : vector<8x32xf32>
    %56 = math.exp %55 : vector<8x32xf32>
    %cst_16 = arith.constant 1.000000e+00 : f32
    %57 = vector.broadcast %cst_16 : f32 to vector<8x32xf32>
    %58 = arith.addf %57, %56 : vector<8x32xf32>
    %59 = arith.divf %57, %58 : vector<8x32xf32>
    %60 = arith.mulf %51, %34 : vector<8x32xf32>
    %61 = arith.mulf %45, %53 : vector<8x32xf32>
    %62 = arith.addf %60, %61 : vector<8x32xf32>
    %63 = math.tanh %62 : vector<8x32xf32>
    %64 = arith.mulf %59, %63 : vector<8x32xf32>
    %65 = vector.extract_strided_slice %5 {offsets = [16, 0], sizes = [8, 128], strides = [1, 1]} : vector<64x128xf32> to vector<8x128xf32>
    %cst_17 = arith.constant dense<0.000000e+00> : vector<8x128xf32>
    %66 = tpu.matmul %64, %6, %cst_17 {dimension_numbers = #tpu.dot_dimension_numbers<[1], [0], [0], [1], [0, 0, 1, 1], [], []>} : vector<8x32xf32>, vector<32x128xf32>, vector<8x128xf32> -> vector<8x128xf32>
    %67 = arith.addf %65, %66 : vector<8x128xf32>
    %68 = vector.extract_strided_slice %67 {offsets = [0, 0], sizes = [8, 32], strides = [1, 1]} : vector<8x128xf32> to vector<8x32xf32>
    %69 = arith.negf %68 : vector<8x32xf32>
    %70 = math.exp %69 : vector<8x32xf32>
    %cst_18 = arith.constant 1.000000e+00 : f32
    %71 = vector.broadcast %cst_18 : f32 to vector<8x32xf32>
    %72 = arith.addf %71, %70 : vector<8x32xf32>
    %73 = arith.divf %71, %72 : vector<8x32xf32>
    %74 = vector.extract_strided_slice %67 {offsets = [0, 32], sizes = [8, 32], strides = [1, 1]} : vector<8x128xf32> to vector<8x32xf32>
    %75 = arith.negf %74 : vector<8x32xf32>
    %76 = math.exp %75 : vector<8x32xf32>
    %cst_19 = arith.constant 1.000000e+00 : f32
    %77 = vector.broadcast %cst_19 : f32 to vector<8x32xf32>
    %78 = arith.addf %77, %76 : vector<8x32xf32>
    %79 = arith.divf %77, %78 : vector<8x32xf32>
    %80 = vector.extract_strided_slice %67 {offsets = [0, 64], sizes = [8, 32], strides = [1, 1]} : vector<8x128xf32> to vector<8x32xf32>
    %81 = math.tanh %80 : vector<8x32xf32>
    %82 = vector.extract_strided_slice %67 {offsets = [0, 96], sizes = [8, 32], strides = [1, 1]} : vector<8x128xf32> to vector<8x32xf32>
    %83 = arith.negf %82 : vector<8x32xf32>
    %84 = math.exp %83 : vector<8x32xf32>
    %cst_20 = arith.constant 1.000000e+00 : f32
    %85 = vector.broadcast %cst_20 : f32 to vector<8x32xf32>
    %86 = arith.addf %85, %84 : vector<8x32xf32>
    %87 = arith.divf %85, %86 : vector<8x32xf32>
    %88 = arith.mulf %79, %62 : vector<8x32xf32>
    %89 = arith.mulf %73, %81 : vector<8x32xf32>
    %90 = arith.addf %88, %89 : vector<8x32xf32>
    %91 = math.tanh %90 : vector<8x32xf32>
    %92 = arith.mulf %87, %91 : vector<8x32xf32>
    %93 = vector.extract_strided_slice %5 {offsets = [24, 0], sizes = [8, 128], strides = [1, 1]} : vector<64x128xf32> to vector<8x128xf32>
    %cst_21 = arith.constant dense<0.000000e+00> : vector<8x128xf32>
    %94 = tpu.matmul %92, %6, %cst_21 {dimension_numbers = #tpu.dot_dimension_numbers<[1], [0], [0], [1], [0, 0, 1, 1], [], []>} : vector<8x32xf32>, vector<32x128xf32>, vector<8x128xf32> -> vector<8x128xf32>
    %95 = arith.addf %93, %94 : vector<8x128xf32>
    %96 = vector.extract_strided_slice %95 {offsets = [0, 0], sizes = [8, 32], strides = [1, 1]} : vector<8x128xf32> to vector<8x32xf32>
    %97 = arith.negf %96 : vector<8x32xf32>
    %98 = math.exp %97 : vector<8x32xf32>
    %cst_22 = arith.constant 1.000000e+00 : f32
    %99 = vector.broadcast %cst_22 : f32 to vector<8x32xf32>
    %100 = arith.addf %99, %98 : vector<8x32xf32>
    %101 = arith.divf %99, %100 : vector<8x32xf32>
    %102 = vector.extract_strided_slice %95 {offsets = [0, 32], sizes = [8, 32], strides = [1, 1]} : vector<8x128xf32> to vector<8x32xf32>
    %103 = arith.negf %102 : vector<8x32xf32>
    %104 = math.exp %103 : vector<8x32xf32>
    %cst_23 = arith.constant 1.000000e+00 : f32
    %105 = vector.broadcast %cst_23 : f32 to vector<8x32xf32>
    %106 = arith.addf %105, %104 : vector<8x32xf32>
    %107 = arith.divf %105, %106 : vector<8x32xf32>
    %108 = vector.extract_strided_slice %95 {offsets = [0, 64], sizes = [8, 32], strides = [1, 1]} : vector<8x128xf32> to vector<8x32xf32>
    %109 = math.tanh %108 : vector<8x32xf32>
    %110 = vector.extract_strided_slice %95 {offsets = [0, 96], sizes = [8, 32], strides = [1, 1]} : vector<8x128xf32> to vector<8x32xf32>
    %111 = arith.negf %110 : vector<8x32xf32>
    %112 = math.exp %111 : vector<8x32xf32>
    %cst_24 = arith.constant 1.000000e+00 : f32
    %113 = vector.broadcast %cst_24 : f32 to vector<8x32xf32>
    %114 = arith.addf %113, %112 : vector<8x32xf32>
    %115 = arith.divf %113, %114 : vector<8x32xf32>
    %116 = arith.mulf %107, %90 : vector<8x32xf32>
    %117 = arith.mulf %101, %109 : vector<8x32xf32>
    %118 = arith.addf %116, %117 : vector<8x32xf32>
    %119 = math.tanh %118 : vector<8x32xf32>
    %120 = arith.mulf %115, %119 : vector<8x32xf32>
    %121 = vector.extract_strided_slice %5 {offsets = [32, 0], sizes = [8, 128], strides = [1, 1]} : vector<64x128xf32> to vector<8x128xf32>
    %cst_25 = arith.constant dense<0.000000e+00> : vector<8x128xf32>
    %122 = tpu.matmul %120, %6, %cst_25 {dimension_numbers = #tpu.dot_dimension_numbers<[1], [0], [0], [1], [0, 0, 1, 1], [], []>} : vector<8x32xf32>, vector<32x128xf32>, vector<8x128xf32> -> vector<8x128xf32>
    %123 = arith.addf %121, %122 : vector<8x128xf32>
    %124 = vector.extract_strided_slice %123 {offsets = [0, 0], sizes = [8, 32], strides = [1, 1]} : vector<8x128xf32> to vector<8x32xf32>
    %125 = arith.negf %124 : vector<8x32xf32>
    %126 = math.exp %125 : vector<8x32xf32>
    %cst_26 = arith.constant 1.000000e+00 : f32
    %127 = vector.broadcast %cst_26 : f32 to vector<8x32xf32>
    %128 = arith.addf %127, %126 : vector<8x32xf32>
    %129 = arith.divf %127, %128 : vector<8x32xf32>
    %130 = vector.extract_strided_slice %123 {offsets = [0, 32], sizes = [8, 32], strides = [1, 1]} : vector<8x128xf32> to vector<8x32xf32>
    %131 = arith.negf %130 : vector<8x32xf32>
    %132 = math.exp %131 : vector<8x32xf32>
    %cst_27 = arith.constant 1.000000e+00 : f32
    %133 = vector.broadcast %cst_27 : f32 to vector<8x32xf32>
    %134 = arith.addf %133, %132 : vector<8x32xf32>
    %135 = arith.divf %133, %134 : vector<8x32xf32>
    %136 = vector.extract_strided_slice %123 {offsets = [0, 64], sizes = [8, 32], strides = [1, 1]} : vector<8x128xf32> to vector<8x32xf32>
    %137 = math.tanh %136 : vector<8x32xf32>
    %138 = vector.extract_strided_slice %123 {offsets = [0, 96], sizes = [8, 32], strides = [1, 1]} : vector<8x128xf32> to vector<8x32xf32>
    %139 = arith.negf %138 : vector<8x32xf32>
    %140 = math.exp %139 : vector<8x32xf32>
    %cst_28 = arith.constant 1.000000e+00 : f32
    %141 = vector.broadcast %cst_28 : f32 to vector<8x32xf32>
    %142 = arith.addf %141, %140 : vector<8x32xf32>
    %143 = arith.divf %141, %142 : vector<8x32xf32>
    %144 = arith.mulf %135, %118 : vector<8x32xf32>
    %145 = arith.mulf %129, %137 : vector<8x32xf32>
    %146 = arith.addf %144, %145 : vector<8x32xf32>
    %147 = math.tanh %146 : vector<8x32xf32>
    %148 = arith.mulf %143, %147 : vector<8x32xf32>
    %149 = vector.extract_strided_slice %5 {offsets = [40, 0], sizes = [8, 128], strides = [1, 1]} : vector<64x128xf32> to vector<8x128xf32>
    %cst_29 = arith.constant dense<0.000000e+00> : vector<8x128xf32>
    %150 = tpu.matmul %148, %6, %cst_29 {dimension_numbers = #tpu.dot_dimension_numbers<[1], [0], [0], [1], [0, 0, 1, 1], [], []>} : vector<8x32xf32>, vector<32x128xf32>, vector<8x128xf32> -> vector<8x128xf32>
    %151 = arith.addf %149, %150 : vector<8x128xf32>
    %152 = vector.extract_strided_slice %151 {offsets = [0, 0], sizes = [8, 32], strides = [1, 1]} : vector<8x128xf32> to vector<8x32xf32>
    %153 = arith.negf %152 : vector<8x32xf32>
    %154 = math.exp %153 : vector<8x32xf32>
    %cst_30 = arith.constant 1.000000e+00 : f32
    %155 = vector.broadcast %cst_30 : f32 to vector<8x32xf32>
    %156 = arith.addf %155, %154 : vector<8x32xf32>
    %157 = arith.divf %155, %156 : vector<8x32xf32>
    %158 = vector.extract_strided_slice %151 {offsets = [0, 32], sizes = [8, 32], strides = [1, 1]} : vector<8x128xf32> to vector<8x32xf32>
    %159 = arith.negf %158 : vector<8x32xf32>
    %160 = math.exp %159 : vector<8x32xf32>
    %cst_31 = arith.constant 1.000000e+00 : f32
    %161 = vector.broadcast %cst_31 : f32 to vector<8x32xf32>
    %162 = arith.addf %161, %160 : vector<8x32xf32>
    %163 = arith.divf %161, %162 : vector<8x32xf32>
    %164 = vector.extract_strided_slice %151 {offsets = [0, 64], sizes = [8, 32], strides = [1, 1]} : vector<8x128xf32> to vector<8x32xf32>
    %165 = math.tanh %164 : vector<8x32xf32>
    %166 = vector.extract_strided_slice %151 {offsets = [0, 96], sizes = [8, 32], strides = [1, 1]} : vector<8x128xf32> to vector<8x32xf32>
    %167 = arith.negf %166 : vector<8x32xf32>
    %168 = math.exp %167 : vector<8x32xf32>
    %cst_32 = arith.constant 1.000000e+00 : f32
    %169 = vector.broadcast %cst_32 : f32 to vector<8x32xf32>
    %170 = arith.addf %169, %168 : vector<8x32xf32>
    %171 = arith.divf %169, %170 : vector<8x32xf32>
    %172 = arith.mulf %163, %146 : vector<8x32xf32>
    %173 = arith.mulf %157, %165 : vector<8x32xf32>
    %174 = arith.addf %172, %173 : vector<8x32xf32>
    %175 = math.tanh %174 : vector<8x32xf32>
    %176 = arith.mulf %171, %175 : vector<8x32xf32>
    %177 = vector.extract_strided_slice %5 {offsets = [48, 0], sizes = [8, 128], strides = [1, 1]} : vector<64x128xf32> to vector<8x128xf32>
    %cst_33 = arith.constant dense<0.000000e+00> : vector<8x128xf32>
    %178 = tpu.matmul %176, %6, %cst_33 {dimension_numbers = #tpu.dot_dimension_numbers<[1], [0], [0], [1], [0, 0, 1, 1], [], []>} : vector<8x32xf32>, vector<32x128xf32>, vector<8x128xf32> -> vector<8x128xf32>
    %179 = arith.addf %177, %178 : vector<8x128xf32>
    %180 = vector.extract_strided_slice %179 {offsets = [0, 0], sizes = [8, 32], strides = [1, 1]} : vector<8x128xf32> to vector<8x32xf32>
    %181 = arith.negf %180 : vector<8x32xf32>
    %182 = math.exp %181 : vector<8x32xf32>
    %cst_34 = arith.constant 1.000000e+00 : f32
    %183 = vector.broadcast %cst_34 : f32 to vector<8x32xf32>
    %184 = arith.addf %183, %182 : vector<8x32xf32>
    %185 = arith.divf %183, %184 : vector<8x32xf32>
    %186 = vector.extract_strided_slice %179 {offsets = [0, 32], sizes = [8, 32], strides = [1, 1]} : vector<8x128xf32> to vector<8x32xf32>
    %187 = arith.negf %186 : vector<8x32xf32>
    %188 = math.exp %187 : vector<8x32xf32>
    %cst_35 = arith.constant 1.000000e+00 : f32
    %189 = vector.broadcast %cst_35 : f32 to vector<8x32xf32>
    %190 = arith.addf %189, %188 : vector<8x32xf32>
    %191 = arith.divf %189, %190 : vector<8x32xf32>
    %192 = vector.extract_strided_slice %179 {offsets = [0, 64], sizes = [8, 32], strides = [1, 1]} : vector<8x128xf32> to vector<8x32xf32>
    %193 = math.tanh %192 : vector<8x32xf32>
    %194 = vector.extract_strided_slice %179 {offsets = [0, 96], sizes = [8, 32], strides = [1, 1]} : vector<8x128xf32> to vector<8x32xf32>
    %195 = arith.negf %194 : vector<8x32xf32>
    %196 = math.exp %195 : vector<8x32xf32>
    %cst_36 = arith.constant 1.000000e+00 : f32
    %197 = vector.broadcast %cst_36 : f32 to vector<8x32xf32>
    %198 = arith.addf %197, %196 : vector<8x32xf32>
    %199 = arith.divf %197, %198 : vector<8x32xf32>
    %200 = arith.mulf %191, %174 : vector<8x32xf32>
    %201 = arith.mulf %185, %193 : vector<8x32xf32>
    %202 = arith.addf %200, %201 : vector<8x32xf32>
    %203 = math.tanh %202 : vector<8x32xf32>
    %204 = arith.mulf %199, %203 : vector<8x32xf32>
    %205 = vector.extract_strided_slice %5 {offsets = [56, 0], sizes = [8, 128], strides = [1, 1]} : vector<64x128xf32> to vector<8x128xf32>
    %cst_37 = arith.constant dense<0.000000e+00> : vector<8x128xf32>
    %206 = tpu.matmul %204, %6, %cst_37 {dimension_numbers = #tpu.dot_dimension_numbers<[1], [0], [0], [1], [0, 0, 1, 1], [], []>} : vector<8x32xf32>, vector<32x128xf32>, vector<8x128xf32> -> vector<8x128xf32>
    %207 = arith.addf %205, %206 : vector<8x128xf32>
    %208 = vector.extract_strided_slice %207 {offsets = [0, 0], sizes = [8, 32], strides = [1, 1]} : vector<8x128xf32> to vector<8x32xf32>
    %209 = arith.negf %208 : vector<8x32xf32>
    %210 = math.exp %209 : vector<8x32xf32>
    %cst_38 = arith.constant 1.000000e+00 : f32
    %211 = vector.broadcast %cst_38 : f32 to vector<8x32xf32>
    %212 = arith.addf %211, %210 : vector<8x32xf32>
    %213 = arith.divf %211, %212 : vector<8x32xf32>
    %214 = vector.extract_strided_slice %207 {offsets = [0, 32], sizes = [8, 32], strides = [1, 1]} : vector<8x128xf32> to vector<8x32xf32>
    %215 = arith.negf %214 : vector<8x32xf32>
    %216 = math.exp %215 : vector<8x32xf32>
    %cst_39 = arith.constant 1.000000e+00 : f32
    %217 = vector.broadcast %cst_39 : f32 to vector<8x32xf32>
    %218 = arith.addf %217, %216 : vector<8x32xf32>
    %219 = arith.divf %217, %218 : vector<8x32xf32>
    %220 = vector.extract_strided_slice %207 {offsets = [0, 64], sizes = [8, 32], strides = [1, 1]} : vector<8x128xf32> to vector<8x32xf32>
    %221 = math.tanh %220 : vector<8x32xf32>
    %222 = vector.extract_strided_slice %207 {offsets = [0, 96], sizes = [8, 32], strides = [1, 1]} : vector<8x128xf32> to vector<8x32xf32>
    %223 = arith.negf %222 : vector<8x32xf32>
    %224 = math.exp %223 : vector<8x32xf32>
    %cst_40 = arith.constant 1.000000e+00 : f32
    %225 = vector.broadcast %cst_40 : f32 to vector<8x32xf32>
    %226 = arith.addf %225, %224 : vector<8x32xf32>
    %227 = arith.divf %225, %226 : vector<8x32xf32>
    %228 = arith.mulf %219, %202 : vector<8x32xf32>
    %229 = arith.mulf %213, %221 : vector<8x32xf32>
    %230 = arith.addf %228, %229 : vector<8x32xf32>
    %231 = math.tanh %230 : vector<8x32xf32>
    %232 = arith.mulf %227, %231 : vector<8x32xf32>
    %c0_41 = arith.constant 0 : index
    %c0_42 = arith.constant 0 : index
    %233 = vector.load %arg4[%c0_41, %c0_42] : memref<8x32xf32, #tpu.memory_space<vmem>>, vector<8x32xf32>
    tpu.vector_store %arg4[%c0_41, %c0_42], %232 {strides = array<i32>} : memref<8x32xf32, #tpu.memory_space<vmem>>, vector<8x32xf32>,
    return
  }
}

</mosaic_0001>

<llo_original>
// kernel: tpu_custom_call.1
$region0: #{tpu_custom_call.1}
  #allocation0 [shape = 'u32[]', space=smem, size = 0x4, offset = 0x4, fixed_abs, tag = 'smem constant byte address 0x4 - core index']
  #allocation1 [shape = 'u32[72,128]{1,0:T(1,128)}', space=vmem, size = 0x9000, scoped, tag = 'internal scratch']
  %s0 = inlined_call_operand.vmem [shape: f32[64,16], index: 0, kind: input, shape index: {}]
  %s1 = inlined_call_operand.vmem [shape: f32[16,128], index: 1, kind: input, shape index: {}]
  %s2 = inlined_call_operand.vmem [shape: f32[32,128], index: 2, kind: input, shape index: {}]
  %s3 = inlined_call_operand.vmem [shape: f32[1,128], index: 3, kind: input, shape index: {}]
  %s4 = inlined_call_operand.hbm [shape: f32[8,32], index: 4, kind: output, shape index: {}]
  %s5 = sld [smem:[#allocation0]]
  $region26: #{tpu_custom_call.1} parent=0
    _
  %s7 = ssub.s32 1, %s5
  %s8 = scalar_select 0, %s7, %s5
  $region1: #{tpu_custom_call.1} parent=0
    #allocation2 [shape = 'u8[4096]{0}', space=vmem, size = 0x1000, scoped, tag = 'output window, operand 0, single buffered']
    #allocation3 [shape = 's32[1]{0}', space=sflag, size = 0x4, scoped, tag = 'scoped memory for tpu_custom_call.1']
    %9 = vsyncpa [#allocation3], 0
    // Predicated region
    $region2: #{tpu_custom_call.1} parent=1 // pred_check
      _
    $region3: #{tpu_custom_call.1} parent=1 // pred_check_branch
      %11 = sbr.rel (0) target = $region5
    $region4: #{tpu_custom_call.1} parent=1 // pred_region
      _
    $region5: #{tpu_custom_call.1} parent=1 // pred_fallthru
      _
    // Predicated region
    $region6: #{tpu_custom_call.1} parent=1 // pred_check
      _
    $region7: #{tpu_custom_call.1} parent=1 // pred_check_branch
      %13 = sbr.rel (0) target = $region9
    $region8: #{tpu_custom_call.1} parent=1 // pred_region
      _
    $region9: #{tpu_custom_call.1} parent=1 // pred_fallthru
      _
    // Predicated region
    $region10: #{tpu_custom_call.1} parent=1 // pred_check
      _
    $region11: #{tpu_custom_call.1} parent=1 // pred_check_branch
      %15 = sbr.rel (0) target = $region13
    $region12: #{tpu_custom_call.1} parent=1 // pred_region
      _
    $region13: #{tpu_custom_call.1} parent=1 // pred_fallthru
      _
    // Predicated region
    $region14: #{tpu_custom_call.1} parent=1 // pred_check
      _
    $region15: #{tpu_custom_call.1} parent=1 // pred_check_branch
      %17 = sbr.rel (0) target = $region17
    $region16: #{tpu_custom_call.1} parent=1 // pred_region
      _
    $region17: #{tpu_custom_call.1} parent=1 // pred_fallthru
      _
    %v18 = vld [vmem:[%s0] sm:$0xff]
    %v19 = vld [vmem:[%s0 + $0x8] sm:$0xff]
    %v20 = vld [vmem:[%s0 + $0x10] sm:$0xff]
    %v21 = vld [vmem:[%s0 + $0x18] sm:$0xff]
    %v22 = vld [vmem:[%s0 + $0x20] sm:$0xff]
    %v23 = vld [vmem:[%s0 + $0x28] sm:$0xff]
    %v24 = vld [vmem:[%s0 + $0x30] sm:$0xff]
    %v25 = vld [vmem:[%s0 + $0x38] sm:$0xff]
    %v26 = vld [vmem:[%s1] sm:$0xff]
    %v27 = vld [vmem:[%s1 + $0x8] sm:$0xff]
    %v28 = vld [vmem:[%s3] sm:$0x1]
    %v30 = vperm.slane %v28, 0
    %vm32 = vcmask 130048
    %v34 = vsel %vm32, %v18, 0
    %v37 = vsel %vm32, %v19, 0
    %v40 = vsel %vm32, %v20, 0
    %v43 = vsel %vm32, %v21, 0
    %v46 = vsel %vm32, %v22, 0
    %v49 = vsel %vm32, %v23, 0
    %v52 = vsel %vm32, %v24, 0
    %v55 = vsel %vm32, %v25, 0
    %57 = vmatpush.msra.mxu0 0.0
    %58 = vmatpush.msra.mxu0 0.0
    %59 = vmatpush.msra.mxu0 0.0
    %60 = vmatpush.msra.mxu0 0.0
    %61 = vmatpush.msra.mxu0 0.0
    %62 = vmatpush.msra.mxu0 0.0
    %63 = vmatpush.msra.mxu0 0.0
    %64 = vmatpush.msra.mxu0 0.0
    %65 = vmatpush.msra.mxu0 0.0
    %66 = vmatpush.msra.mxu0 0.0
    %67 = vmatpush.msra.mxu0 0.0
    %68 = vmatpush.msra.mxu0 0.0
    %69 = vmatpush.msra.mxu0 0.0
    %70 = vmatpush.msra.mxu0 0.0
    %71 = vmatpush.msra.mxu0 %v27
    %72 = vmatpush.msra.mxu0 %v26
    %73 = vmatmul.f32.gmra.mxu0 %v34
    %v74 = vpop.f32.mrf.mxu0
    %v75 = vadd.f32 %v30, %v74
    %76 = vmatmul.f32.gmra.mxu0 %v37
    %v77 = vpop.f32.mrf.mxu0
    %v78 = vadd.f32 %v30, %v77
    %79 = vmatmul.f32.gmra.mxu0 %v40
    %v80 = vpop.f32.mrf.mxu0
    %v81 = vadd.f32 %v30, %v80
    %82 = vmatmul.f32.gmra.mxu0 %v43
    %v83 = vpop.f32.mrf.mxu0
    %v84 = vadd.f32 %v30, %v83
    %85 = vmatmul.f32.gmra.mxu0 %v46
    %v86 = vpop.f32.mrf.mxu0
    %v87 = vadd.f32 %v30, %v86
    %88 = vmatmul.f32.gmra.mxu0 %v49
    %v89 = vpop.f32.mrf.mxu0
    %v90 = vadd.f32 %v30, %v89
    %91 = vmatmul.f32.gmra.mxu0 %v52
    %v92 = vpop.f32.mrf.mxu0
    %v93 = vadd.f32 %v30, %v92
    %94 = vmatmul.f32.gmra.mxu0 %v55
    %v95 = vpop.f32.mrf.mxu0
    %v96 = vadd.f32 %v30, %v95
    %97 = vdwg.mxu0
    %v98 = vld [vmem:[%s2] sm:$0xff]
    %v99 = vld [vmem:[%s2 + $0x8] sm:$0xff]
    %v100 = vld [vmem:[%s2 + $0x10] sm:$0xff]
    %v101 = vld [vmem:[%s2 + $0x18] sm:$0xff]
    %vm102 = vcmask 261120
    %v104 = vsel %vm102, 0.0, 0
    %106 = vmatpush.msra.mxu0 0.0
    %107 = vmatpush.msra.mxu0 0.0
    %108 = vmatpush.msra.mxu0 0.0
    %109 = vmatpush.msra.mxu0 0.0
    %110 = vmatpush.msra.mxu0 0.0
    %111 = vmatpush.msra.mxu0 0.0
    %112 = vmatpush.msra.mxu0 0.0
    %113 = vmatpush.msra.mxu0 0.0
    %114 = vmatpush.msra.mxu0 0.0
    %115 = vmatpush.msra.mxu0 0.0
    %116 = vmatpush.msra.mxu0 0.0
    %117 = vmatpush.msra.mxu0 0.0
    %118 = vmatpush.msra.mxu0 %v101
    %119 = vmatpush.msra.mxu0 %v100
    %120 = vmatpush.msra.mxu0 %v99
    %121 = vmatpush.msra.mxu0 %v98
    %122 = vmatmul.f32.gmra.mxu0 %v104
    %v123 = vpop.f32.mrf.mxu0
    %v124 = vadd.f32 0.0, %v123
    %125 = vdwg.mxu0
    %v126 = vadd.f32 %v75, %v124
    %v127 = vxor.u32 %v126, 2147483648
    %v128 = vmul.f32 %v127, 1.442695
    %v129 = vpow.pop %v128
    %v130 = vadd.f32 %v129, 1.0
    %v131 = vrcp.pop %v130
    %v132 = vmul.f32 %v130, %v131
    %v133 = vsub.f32 1.0, %v132
    %v134 = vmul.f32 %v131, %v133
    %v135 = vadd.f32 %v131, %v134
    %vm136 = vweird.f32 %v130
    %vm137 = vweird.f32 %v131
    %vm138 = vmor %vm136, %vm137
    %v139 = vsel %vm138, %v131, %v135
    %v140 = vand.u32 2147483647, %v130
    %vm141 = vcmp.eq.f32.partialorder %v140, 8.507059e+37
    %v142 = vand.u32 %v130, 2147483648
    %v143 = vor.u32 1.1754944e-38, %v142
    %v144 = vsel %vm141, %v143, %v139
    %v145 = vmul.f32 1.0, %v144
    %v146 = vtanh.pop %v126
    %v147 = vmul.f32 %v145, 0.0
    %149 = vrot.lane.b32.xlu0 %v146, 64
    %v150 = vpop.permute.xlu0 %149
    %v152 = vmul.f32 %v145, %v150
    %154 = vrot.lane.b32.xlu0 %v152, 32
    %v155 = vpop.permute.xlu0 %154
    %v157 = vadd.f32 %v147, %v155
    %v158 = vtanh.pop %v157
    %160 = vrot.lane.b32.xlu0 %v158, 64
    %v161 = vpop.permute.xlu0 %160
    %v163 = vmul.f32 %v145, %v161
    %165 = vrot.lane.b32.xlu0 %v163, 32
    %v166 = vpop.permute.xlu0 %165
    %v167 = vsel %vm102, %v166, 0
    %169 = vmatpush.msra.mxu0 0.0
    %170 = vmatpush.msra.mxu0 0.0
    %171 = vmatpush.msra.mxu0 0.0
    %172 = vmatpush.msra.mxu0 0.0
    %173 = vmatpush.msra.mxu0 0.0
    %174 = vmatpush.msra.mxu0 0.0
    %175 = vmatpush.msra.mxu0 0.0
    %176 = vmatpush.msra.mxu0 0.0
    %177 = vmatpush.msra.mxu0 0.0
    %178 = vmatpush.msra.mxu0 0.0
    %179 = vmatpush.msra.mxu0 0.0
    %180 = vmatpush.msra.mxu0 0.0
    %181 = vmatpush.msra.mxu0 %v101
    %182 = vmatpush.msra.mxu0 %v100
    %183 = vmatpush.msra.mxu0 %v99
    %184 = vmatpush.msra.mxu0 %v98
    %185 = vmatmul.f32.gmra.mxu0 %v167
    %v186 = vpop.f32.mrf.mxu0
    %v187 = vadd.f32 0.0, %v186
    %188 = vdwg.mxu0
    %v189 = vadd.f32 %v78, %v187
    %v190 = vxor.u32 %v189, 2147483648
    %v191 = vmul.f32 %v190, 1.442695
    %v192 = vpow.pop %v191
    %v193 = vadd.f32 %v192, 1.0
    %v194 = vrcp.pop %v193
    %v195 = vmul.f32 %v193, %v194
    %v196 = vsub.f32 1.0, %v195
    %v197 = vmul.f32 %v194, %v196
    %v198 = vadd.f32 %v194, %v197
    %vm199 = vweird.f32 %v193
    %vm200 = vweird.f32 %v194
    %vm201 = vmor %vm199, %vm200
    %v202 = vsel %vm201, %v194, %v198
    %v203 = vand.u32 2147483647, %v193
    %vm204 = vcmp.eq.f32.partialorder %v203, 8.507059e+37
    %v205 = vand.u32 %v193, 2147483648
    %v206 = vor.u32 1.1754944e-38, %v205
    %v207 = vsel %vm204, %v206, %v202
    %v208 = vmul.f32 1.0, %v207
    %v209 = vtanh.pop %v189
    %v210 = vmul.f32 %v208, %v157
    %212 = vrot.lane.b32.xlu0 %v209, 64
    %v213 = vpop.permute.xlu0 %212
    %v215 = vmul.f32 %v208, %v213
    %217 = vrot.lane.b32.xlu0 %v215, 32
    %v218 = vpop.permute.xlu0 %217
    %v220 = vadd.f32 %v210, %v218
    %v221 = vtanh.pop %v220
    %223 = vrot.lane.b32.xlu0 %v221, 64
    %v224 = vpop.permute.xlu0 %223
    %v226 = vmul.f32 %v208, %v224
    %228 = vrot.lane.b32.xlu0 %v226, 32
    %v229 = vpop.permute.xlu0 %228
    %v230 = vsel %vm102, %v229, 0
    %232 = vmatpush.msra.mxu0 0.0
    %233 = vmatpush.msra.mxu0 0.0
    %234 = vmatpush.msra.mxu0 0.0
    %235 = vmatpush.msra.mxu0 0.0
    %236 = vmatpush.msra.mxu0 0.0
    %237 = vmatpush.msra.mxu0 0.0
    %238 = vmatpush.msra.mxu0 0.0
    %239 = vmatpush.msra.mxu0 0.0
    %240 = vmatpush.msra.mxu0 0.0
    %241 = vmatpush.msra.mxu0 0.0
    %242 = vmatpush.msra.mxu0 0.0
    %243 = vmatpush.msra.mxu0 0.0
    %244 = vmatpush.msra.mxu0 %v101
    %245 = vmatpush.msra.mxu0 %v100
    %246 = vmatpush.msra.mxu0 %v99
    %247 = vmatpush.msra.mxu0 %v98
    %248 = vmatmul.f32.gmra.mxu0 %v230
    %v249 = vpop.f32.mrf.mxu0
    %v250 = vadd.f32 0.0, %v249
    %251 = vdwg.mxu0
    %v252 = vadd.f32 %v81, %v250
    %v253 = vxor.u32 %v252, 2147483648
    %v254 = vmul.f32 %v253, 1.442695
    %v255 = vpow.pop %v254
    %v256 = vadd.f32 %v255, 1.0
    %v257 = vrcp.pop %v256
    %v258 = vmul.f32 %v256, %v257
    %v259 = vsub.f32 1.0, %v258
    %v260 = vmul.f32 %v257, %v259
    %v261 = vadd.f32 %v257, %v260
    %vm262 = vweird.f32 %v256
    %vm263 = vweird.f32 %v257
    %vm264 = vmor %vm262, %vm263
    %v265 = vsel %vm264, %v257, %v261
    %v266 = vand.u32 2147483647, %v256
    %vm267 = vcmp.eq.f32.partialorder %v266, 8.507059e+37
    %v268 = vand.u32 %v256, 2147483648
    %v269 = vor.u32 1.1754944e-38, %v268
    %v270 = vsel %vm267, %v269, %v265
    %v271 = vmul.f32 1.0, %v270
    %v272 = vtanh.pop %v252
    %v273 = vmul.f32 %v271, %v220
    %275 = vrot.lane.b32.xlu0 %v272, 64
    %v276 = vpop.permute.xlu0 %275
    %v278 = vmul.f32 %v271, %v276
    %280 = vrot.lane.b32.xlu0 %v278, 32
    %v281 = vpop.permute.xlu0 %280
    %v283 = vadd.f32 %v273, %v281
    %v284 = vtanh.pop %v283
    %286 = vrot.lane.b32.xlu0 %v284, 64
    %v287 = vpop.permute.xlu0 %286
    %v289 = vmul.f32 %v271, %v287
    %291 = vrot.lane.b32.xlu0 %v289, 32
    %v292 = vpop.permute.xlu0 %291
    %v293 = vsel %vm102, %v292, 0
    %295 = vmatpush.msra.mxu0 0.0
    %296 = vmatpush.msra.mxu0 0.0
    %297 = vmatpush.msra.mxu0 0.0
    %298 = vmatpush.msra.mxu0 0.0
    %299 = vmatpush.msra.mxu0 0.0
    %300 = vmatpush.msra.mxu0 0.0
    %301 = vmatpush.msra.mxu0 0.0
    %302 = vmatpush.msra.mxu0 0.0
    %303 = vmatpush.msra.mxu0 0.0
    %304 = vmatpush.msra.mxu0 0.0
    %305 = vmatpush.msra.mxu0 0.0
    %306 = vmatpush.msra.mxu0 0.0
    %307 = vmatpush.msra.mxu0 %v101
    %308 = vmatpush.msra.mxu0 %v100
    %309 = vmatpush.msra.mxu0 %v99
    %310 = vmatpush.msra.mxu0 %v98
    %311 = vmatmul.f32.gmra.mxu0 %v293
    %v312 = vpop.f32.mrf.mxu0
    %v313 = vadd.f32 0.0, %v312
    %314 = vdwg.mxu0
    %v315 = vadd.f32 %v84, %v313
    %v316 = vxor.u32 %v315, 2147483648
    %v317 = vmul.f32 %v316, 1.442695
    %v318 = vpow.pop %v317
    %v319 = vadd.f32 %v318, 1.0
    %v320 = vrcp.pop %v319
    %v321 = vmul.f32 %v319, %v320
    %v322 = vsub.f32 1.0, %v321
    %v323 = vmul.f32 %v320, %v322
    %v324 = vadd.f32 %v320, %v323
    %vm325 = vweird.f32 %v319
    %vm326 = vweird.f32 %v320
    %vm327 = vmor %vm325, %vm326
    %v328 = vsel %vm327, %v320, %v324
    %v329 = vand.u32 2147483647, %v319
    %vm330 = vcmp.eq.f32.partialorder %v329, 8.507059e+37
    %v331 = vand.u32 %v319, 2147483648
    %v332 = vor.u32 1.1754944e-38, %v331
    %v333 = vsel %vm330, %v332, %v328
    %v334 = vmul.f32 1.0, %v333
    %v335 = vtanh.pop %v315
    %v336 = vmul.f32 %v334, %v283
    %338 = vrot.lane.b32.xlu0 %v335, 64
    %v339 = vpop.permute.xlu0 %338
    %v341 = vmul.f32 %v334, %v339
    %343 = vrot.lane.b32.xlu0 %v341, 32
    %v344 = vpop.permute.xlu0 %343
    %v346 = vadd.f32 %v336, %v344
    %v347 = vtanh.pop %v346
    %349 = vrot.lane.b32.xlu0 %v347, 64
    %v350 = vpop.permute.xlu0 %349
    %v352 = vmul.f32 %v334, %v350
    %354 = vrot.lane.b32.xlu0 %v352, 32
    %v355 = vpop.permute.xlu0 %354
    %v356 = vsel %vm102, %v355, 0
    %358 = vmatpush.msra.mxu0 0.0
    %359 = vmatpush.msra.mxu0 0.0
    %360 = vmatpush.msra.mxu0 0.0
    %361 = vmatpush.msra.mxu0 0.0
    %362 = vmatpush.msra.mxu0 0.0
    %363 = vmatpush.msra.mxu0 0.0
    %364 = vmatpush.msra.mxu0 0.0
    %365 = vmatpush.msra.mxu0 0.0
    %366 = vmatpush.msra.mxu0 0.0
    %367 = vmatpush.msra.mxu0 0.0
    %368 = vmatpush.msra.mxu0 0.0
    %369 = vmatpush.msra.mxu0 0.0
    %370 = vmatpush.msra.mxu0 %v101
    %371 = vmatpush.msra.mxu0 %v100
    %372 = vmatpush.msra.mxu0 %v99
    %373 = vmatpush.msra.mxu0 %v98
    %374 = vmatmul.f32.gmra.mxu0 %v356
    %v375 = vpop.f32.mrf.mxu0
    %v376 = vadd.f32 0.0, %v375
    %377 = vdwg.mxu0
    %v378 = vadd.f32 %v87, %v376
    %v379 = vxor.u32 %v378, 2147483648
    %v380 = vmul.f32 %v379, 1.442695
    %v381 = vpow.pop %v380
    %v382 = vadd.f32 %v381, 1.0
    %v383 = vrcp.pop %v382
    %v384 = vmul.f32 %v382, %v383
    %v385 = vsub.f32 1.0, %v384
    %v386 = vmul.f32 %v383, %v385
    %v387 = vadd.f32 %v383, %v386
    %vm388 = vweird.f32 %v382
    %vm389 = vweird.f32 %v383
    %vm390 = vmor %vm388, %vm389
    %v391 = vsel %vm390, %v383, %v387
    %v392 = vand.u32 2147483647, %v382
    %vm393 = vcmp.eq.f32.partialorder %v392, 8.507059e+37
    %v394 = vand.u32 %v382, 2147483648
    %v395 = vor.u32 1.1754944e-38, %v394
    %v396 = vsel %vm393, %v395, %v391
    %v397 = vmul.f32 1.0, %v396
    %v398 = vtanh.pop %v378
    %v399 = vmul.f32 %v397, %v346
    %401 = vrot.lane.b32.xlu0 %v398, 64
    %v402 = vpop.permute.xlu0 %401
    %v404 = vmul.f32 %v397, %v402
    %406 = vrot.lane.b32.xlu0 %v404, 32
    %v407 = vpop.permute.xlu0 %406
    %v409 = vadd.f32 %v399, %v407
    %v410 = vtanh.pop %v409
    %412 = vrot.lane.b32.xlu0 %v410, 64
    %v413 = vpop.permute.xlu0 %412
    %v415 = vmul.f32 %v397, %v413
    %417 = vrot.lane.b32.xlu0 %v415, 32
    %v418 = vpop.permute.xlu0 %417
    %v419 = vsel %vm102, %v418, 0
    %421 = vmatpush.msra.mxu0 0.0
    %422 = vmatpush.msra.mxu0 0.0
    %423 = vmatpush.msra.mxu0 0.0
    %424 = vmatpush.msra.mxu0 0.0
    %425 = vmatpush.msra.mxu0 0.0
    %426 = vmatpush.msra.mxu0 0.0
    %427 = vmatpush.msra.mxu0 0.0
    %428 = vmatpush.msra.mxu0 0.0
    %429 = vmatpush.msra.mxu0 0.0
    %430 = vmatpush.msra.mxu0 0.0
    %431 = vmatpush.msra.mxu0 0.0
    %432 = vmatpush.msra.mxu0 0.0
    %433 = vmatpush.msra.mxu0 %v101
    %434 = vmatpush.msra.mxu0 %v100
    %435 = vmatpush.msra.mxu0 %v99
    %436 = vmatpush.msra.mxu0 %v98
    %437 = vmatmul.f32.gmra.mxu0 %v419
    %v438 = vpop.f32.mrf.mxu0
    %v439 = vadd.f32 0.0, %v438
    %440 = vdwg.mxu0
    %v441 = vadd.f32 %v90, %v439
    %v442 = vxor.u32 %v441, 2147483648
    %v443 = vmul.f32 %v442, 1.442695
    %v444 = vpow.pop %v443
    %v445 = vadd.f32 %v444, 1.0
    %v446 = vrcp.pop %v445
    %v447 = vmul.f32 %v445, %v446
    %v448 = vsub.f32 1.0, %v447
    %v449 = vmul.f32 %v446, %v448
    %v450 = vadd.f32 %v446, %v449
    %vm451 = vweird.f32 %v445
    %vm452 = vweird.f32 %v446
    %vm453 = vmor %vm451, %vm452
    %v454 = vsel %vm453, %v446, %v450
    %v455 = vand.u32 2147483647, %v445
    %vm456 = vcmp.eq.f32.partialorder %v455, 8.507059e+37
    %v457 = vand.u32 %v445, 2147483648
    %v458 = vor.u32 1.1754944e-38, %v457
    %v459 = vsel %vm456, %v458, %v454
    %v460 = vmul.f32 1.0, %v459
    %v461 = vtanh.pop %v441
    %v462 = vmul.f32 %v460, %v409
    %464 = vrot.lane.b32.xlu0 %v461, 64
    %v465 = vpop.permute.xlu0 %464
    %v467 = vmul.f32 %v460, %v465
    %469 = vrot.lane.b32.xlu0 %v467, 32
    %v470 = vpop.permute.xlu0 %469
    %v472 = vadd.f32 %v462, %v470
    %v473 = vtanh.pop %v472
    %475 = vrot.lane.b32.xlu0 %v473, 64
    %v476 = vpop.permute.xlu0 %475
    %v478 = vmul.f32 %v460, %v476
    %480 = vrot.lane.b32.xlu0 %v478, 32
    %v481 = vpop.permute.xlu0 %480
    %v482 = vsel %vm102, %v481, 0
    %484 = vmatpush.msra.mxu0 0.0
    %485 = vmatpush.msra.mxu0 0.0
    %486 = vmatpush.msra.mxu0 0.0
    %487 = vmatpush.msra.mxu0 0.0
    %488 = vmatpush.msra.mxu0 0.0
    %489 = vmatpush.msra.mxu0 0.0
    %490 = vmatpush.msra.mxu0 0.0
    %491 = vmatpush.msra.mxu0 0.0
    %492 = vmatpush.msra.mxu0 0.0
    %493 = vmatpush.msra.mxu0 0.0
    %494 = vmatpush.msra.mxu0 0.0
    %495 = vmatpush.msra.mxu0 0.0
    %496 = vmatpush.msra.mxu0 %v101
    %497 = vmatpush.msra.mxu0 %v100
    %498 = vmatpush.msra.mxu0 %v99
    %499 = vmatpush.msra.mxu0 %v98
    %500 = vmatmul.f32.gmra.mxu0 %v482
    %v501 = vpop.f32.mrf.mxu0
    %v502 = vadd.f32 0.0, %v501
    %503 = vdwg.mxu0
    %v504 = vadd.f32 %v93, %v502
    %v505 = vxor.u32 %v504, 2147483648
    %v506 = vmul.f32 %v505, 1.442695
    %v507 = vpow.pop %v506
    %v508 = vadd.f32 %v507, 1.0
    %v509 = vrcp.pop %v508
    %v510 = vmul.f32 %v508, %v509
    %v511 = vsub.f32 1.0, %v510
    %v512 = vmul.f32 %v509, %v511
    %v513 = vadd.f32 %v509, %v512
    %vm514 = vweird.f32 %v508
    %vm515 = vweird.f32 %v509
    %vm516 = vmor %vm514, %vm515
    %v517 = vsel %vm516, %v509, %v513
    %v518 = vand.u32 2147483647, %v508
    %vm519 = vcmp.eq.f32.partialorder %v518, 8.507059e+37
    %v520 = vand.u32 %v508, 2147483648
    %v521 = vor.u32 1.1754944e-38, %v520
    %v522 = vsel %vm519, %v521, %v517
    %v523 = vmul.f32 1.0, %v522
    %v524 = vtanh.pop %v504
    %v525 = vmul.f32 %v523, %v472
    %527 = vrot.lane.b32.xlu0 %v524, 64
    %v528 = vpop.permute.xlu0 %527
    %v530 = vmul.f32 %v523, %v528
    %532 = vrot.lane.b32.xlu0 %v530, 32
    %v533 = vpop.permute.xlu0 %532
    %v535 = vadd.f32 %v525, %v533
    %v536 = vtanh.pop %v535
    %538 = vrot.lane.b32.xlu0 %v536, 64
    %v539 = vpop.permute.xlu0 %538
    %v541 = vmul.f32 %v523, %v539
    %543 = vrot.lane.b32.xlu0 %v541, 32
    %v544 = vpop.permute.xlu0 %543
    %v545 = vsel %vm102, %v544, 0
    %547 = vmatpush.msra.mxu0 0.0
    %548 = vmatpush.msra.mxu0 0.0
    %549 = vmatpush.msra.mxu0 0.0
    %550 = vmatpush.msra.mxu0 0.0
    %551 = vmatpush.msra.mxu0 0.0
    %552 = vmatpush.msra.mxu0 0.0
    %553 = vmatpush.msra.mxu0 0.0
    %554 = vmatpush.msra.mxu0 0.0
    %555 = vmatpush.msra.mxu0 0.0
    %556 = vmatpush.msra.mxu0 0.0
    %557 = vmatpush.msra.mxu0 0.0
    %558 = vmatpush.msra.mxu0 0.0
    %559 = vmatpush.msra.mxu0 %v101
    %560 = vmatpush.msra.mxu0 %v100
    %561 = vmatpush.msra.mxu0 %v99
    %562 = vmatpush.msra.mxu0 %v98
    %563 = vmatmul.f32.gmra.mxu0 %v545
    %v564 = vpop.f32.mrf.mxu0
    %v565 = vadd.f32 0.0, %v564
    %566 = vdwg.mxu0
    %v567 = vadd.f32 %v96, %v565
    %v568 = vxor.u32 %v567, 2147483648
    %v569 = vmul.f32 %v568, 1.442695
    %v570 = vpow.pop %v569
    %v571 = vadd.f32 %v570, 1.0
    %v572 = vrcp.pop %v571
    %v573 = vmul.f32 %v571, %v572
    %v574 = vsub.f32 1.0, %v573
    %v575 = vmul.f32 %v572, %v574
    %v576 = vadd.f32 %v572, %v575
    %vm577 = vweird.f32 %v571
    %vm578 = vweird.f32 %v572
    %vm579 = vmor %vm577, %vm578
    %v580 = vsel %vm579, %v572, %v576
    %v581 = vand.u32 2147483647, %v571
    %vm582 = vcmp.eq.f32.partialorder %v581, 8.507059e+37
    %v583 = vand.u32 %v571, 2147483648
    %v584 = vor.u32 1.1754944e-38, %v583
    %v585 = vsel %vm582, %v584, %v580
    %v586 = vmul.f32 1.0, %v585
    %v587 = vtanh.pop %v567
    %v588 = vmul.f32 %v586, %v535
    %590 = vrot.lane.b32.xlu0 %v587, 64
    %v591 = vpop.permute.xlu0 %590
    %v593 = vmul.f32 %v586, %v591
    %595 = vrot.lane.b32.xlu0 %v593, 32
    %v596 = vpop.permute.xlu0 %595
    %v598 = vadd.f32 %v588, %v596
    %v599 = vtanh.pop %v598
    %601 = vrot.lane.b32.xlu0 %v599, 64
    %v602 = vpop.permute.xlu0 %601
    %v604 = vmul.f32 %v586, %v602
    %606 = vrot.lane.b32.xlu0 %v604, 32
    %v607 = vpop.permute.xlu0 %606
    %609 = vst.msk [vmem:[#allocation2] sm:$0xff] %vm102, %v607
    // Predicated region
    $region18: #{tpu_custom_call.1} parent=1 // pred_check
      _
    $region19: #{tpu_custom_call.1} parent=1 // pred_check_branch
      %611 = sbr.rel (0) target = $region21
    $region20: #{tpu_custom_call.1} parent=1 // pred_region
      %613 = vsyncadd [#allocation3], 0
      %s615 = sshll.u32 [#allocation2], 4
      %s616 = int_to_ptr.vmem [resolvable:$true] %s615
      %s617 = sshll.u32 %s4, 4
      %s618 = int_to_ptr.hbm [resolvable:$true] %s617
      %620 = dma.vmem_to_hbm [thread:$0]  %s616, 128, %s618, [#allocation3]
    $region21: #{tpu_custom_call.1} parent=1 // pred_fallthru
      _
    // Predicated region
    $region22: #{tpu_custom_call.1} parent=1 // pred_check
      _
    $region23: #{tpu_custom_call.1} parent=1 // pred_check_branch
      %622 = sbr.rel (0) target = $region25
    $region24: #{tpu_custom_call.1} parent=1 // pred_region
      %624 = dma.done [#allocation3], 128
    $region25: #{tpu_custom_call.1} parent=1 // pred_fallthru
      _
    %625 = vsyncpa [#allocation3], 1

</llo_original>
